<compile_context>
chip_gen: v6e
topology: v6e:2x2x1
jax: 0.10.0
libtpu: 0.0.40
codegen_flags: <defaults>
</compile_context>

<pallas_src>
import functools

import jax
import jax.numpy as jnp
from jax.experimental import pallas as pl
from jax.experimental.pallas import tpu as pltpu

# ---- model hyper-parameters (match the torch module's __init__ args) --------
INPUT_DIM = 1
OUTPUT_DIM = 1
N_HIDDEN_LAYERS = 3            # torch: input_layer + (N-1) hidden + output_layer
NEURONS = 32
N_SAMPLES = 20                 # n_samples in the torch script
N_LAYERS = N_HIDDEN_LAYERS + 1 # total Linear layers in the packed slabs
_BIAS_LANES = 128              # bias slab packed as one aligned (NEURONS, 128) tile

# TODO(synk): the n_hidden_layers == 0 "simple linear regression" branch of the
# torch module is not implemented here (the script's config uses n_hidden_layers=3).


def _mlp_kernel(x_ref, w_ref, b_ref, o_ref, *, n_hidden_layers, compute_dtype):
    """Fused MLP forward, transposed (feature-major / batch-on-lanes) layout.

    x_ref: (1, bt)            input samples, batch on the lane axis
    w_ref: (L, 32, 32)        packed weights:
                                [0]      input layer weight in column 0
                                [1..L-2] hidden (out,in) weights
                                [L-1]    output layer weight (transposed) in column 0
    b_ref: (32, 128)          packed biases, layer k's bias in column k
    o_ref: (1, bt)            lane-dense output
    """
    last = n_hidden_layers  # index of output layer slot (= L-1)

    # ---- input layer (1 -> 32): outer product on the VPU, no MXU ------------
    w_in = w_ref[0, :, 0:1]                               # (32, 1)
    h = jnp.tanh(w_in * x_ref[...] + b_ref[:, 0:1])       # (32, bt), f32

    # ---- hidden layers (32 -> 32): real matmuls on the MXU -------------------
    # Only the dot is cast to compute_dtype (bf16 => ~3x fewer MXU passes on
    # all generations); bias add and tanh stay f32 so v5e's VPU/EUP (no bf16)
    # are unaffected and torch fp32 semantics are preserved by default.
    for k in range(1, n_hidden_layers):                   # static, unrolled
        hk = jnp.dot(w_ref[k].astype(compute_dtype), h.astype(compute_dtype),
                     preferred_element_type=jnp.float32)
        h = jnp.tanh(hk + b_ref[:, k:k + 1])
        # TODO(synk): if a bundle dump shows the single EUP slot (tanh) is the
        # binding unit on v6e/v7x, feed tanh in bf16 there (or use a VALU
        # rational approximation on v5e, whose EUP has no bf16).

    # ---- output layer (32 -> 1): per-column dot on VPU/XLU, no MXU ----------
    w_out = w_ref[last, :, 0:1]                           # (32, 1)
    out = jnp.sum(w_out * h, axis=0, keepdims=True)       # (1, bt)
    o_ref[...] = (out + b_ref[0:1, last:last + 1]).astype(o_ref.dtype)


def neural_net_forward(x, packed_params, *, batch_tile=8192,
                       compute_dtype=jnp.float32, core_parallel=False):
    """Pallas forward pass. x: (batch, 1) float32 -> (batch, 1) float32."""
    w_packed, b_packed = packed_params
    n = x.shape[0]
    assert x.shape[1] == INPUT_DIM == 1 and OUTPUT_DIM == 1

    x_t = x.T                                              # (1, n), lane-dense

    if n <= batch_tile:
        tile = n                       # single full-array block (no (8,128) rule)
    else:
        # Partial blocks require the lane dim to be a multiple of 128.
        tile = pl.cdiv(batch_tile, 128) * 128
    grid = (pl.cdiv(n, tile),)
    # No jnp.pad: Pallas masks the ragged final block's reads/writes, so we
    # never materialize a padded copy of x in HBM (garbage lanes stay confined
    # to the masked-off output columns; there is no reduction over batch).

    kernel = functools.partial(_mlp_kernel,
                               n_hidden_layers=N_HIDDEN_LAYERS,
                               compute_dtype=compute_dtype)

    # "parallel" is effectively inert; CORE_PARALLEL genuinely shards the batch
    # grid across v7x's 2 TensorCores (needs >= 2 grid steps). Opt-in because
    # v5e/v6e have a single TC.
    sem = pltpu.CORE_PARALLEL if core_parallel else "parallel"

    out_t = pl.pallas_call(
        kernel,
        out_shape=jax.ShapeDtypeStruct((OUTPUT_DIM, n), jnp.float32),
        grid=grid,
        in_specs=[
            pl.BlockSpec((INPUT_DIM, tile), lambda i: (0, i)),
            # weights/biases: same block every step -> VMEM resident across grid
            pl.BlockSpec(w_packed.shape, lambda i: (0, 0, 0)),
            pl.BlockSpec(b_packed.shape, lambda i: (0, 0)),
        ],
        out_specs=pl.BlockSpec((OUTPUT_DIM, tile), lambda i: (0, i)),
        compiler_params=pltpu.CompilerParams(dimension_semantics=(sem,)),
    )(x_t, w_packed, b_packed)

    return out_t.T                                         # (n, 1)


# ---------------------------- parameter handling -----------------------------
def init_torch_params(key):
    """Torch-layout params (weight (out,in), bias (out,)), U(-1/sqrt(fan_in))."""
    ks = jax.random.split(key, 2 * N_LAYERS)

    def uniform(k, shape, fan_in):
        bound = 1.0 / jnp.sqrt(jnp.float32(fan_in))
        return jax.random.uniform(k, shape, jnp.float32, -bound, bound)

    w_in = uniform(ks[0], (NEURONS, INPUT_DIM), INPUT_DIM)
    b_in = uniform(ks[1], (NEURONS,), INPUT_DIM)
    hidden = []
    for i in range(N_HIDDEN_LAYERS - 1):
        hidden.append((uniform(ks[2 + 2 * i], (NEURONS, NEURONS), NEURONS),
                       uniform(ks[3 + 2 * i], (NEURONS,), NEURONS)))
    w_out = uniform(ks[-2], (OUTPUT_DIM, NEURONS), NEURONS)
    b_out = uniform(ks[-1], (OUTPUT_DIM,), NEURONS)
    return (w_in, b_in), hidden, (w_out, b_out)


def pack_params(torch_params):
    """Pack all layers into one weight slab + one lane-aligned bias slab."""
    (w_in, b_in), hidden, (w_out, b_out) = torch_params
    w = jnp.zeros((N_LAYERS, NEURONS, NEURONS), jnp.float32)
    b = jnp.zeros((NEURONS, _BIAS_LANES), jnp.float32)     # layer k bias -> col k
    w = w.at[0, :, 0].set(w_in[:, 0])                      # input weight as column 0
    b = b.at[:, 0].set(b_in)
    for i, (wk, bk) in enumerate(hidden):
        w = w.at[1 + i].set(wk)
        b = b.at[:, 1 + i].set(bk)
    w = w.at[N_LAYERS - 1, :, 0].set(w_out[0, :])          # output weight^T as column 0
    b = b.at[0, N_LAYERS - 1].set(b_out[0])
    return w, b


def reference_forward(x, torch_params):
    """Plain-JAX reference, identical math to the torch forward."""
    (w_in, b_in), hidden, (w_out, b_out) = torch_params
    h = jnp.tanh(x @ w_in.T + b_in)
    for wk, bk in hidden:
        h = jnp.tanh(h @ wk.T + bk)
    return h @ w_out.T + b_out


if __name__ == "__main__":
    key = jax.random.PRNGKey(0)
    k_x, k_x2, k_p = jax.random.split(key, 3)

    torch_params = init_torch_params(k_p)
    packed = pack_params(torch_params)

    # --- small case (matches the torch script: 20 samples, single block) -----
    x = 2.0 * jnp.pi * jax.random.uniform(k_x, (N_SAMPLES, INPUT_DIM), jnp.float32)
    out = jax.block_until_ready(neural_net_forward(x, packed))
    ref = reference_forward(x, torch_params)
    assert out.shape == (N_SAMPLES, OUTPUT_DIM)
    assert jnp.allclose(out, ref, atol=1e-5, rtol=1e-5), "mismatch (small batch)"

    # --- grid path: ragged final block, no wrapper-side padding --------------
    xb = 2.0 * jnp.pi * jax.random.uniform(k_x2, (2100, INPUT_DIM), jnp.float32)
    out_b = jax.block_until_ready(neural_net_forward(xb, packed, batch_tile=1024))
    ref_b = reference_forward(xb, torch_params)
    assert out_b.shape == (2100, OUTPUT_DIM)
    assert jnp.allclose(out_b, ref_b, atol=1e-5, rtol=1e-5), "mismatch (grid path)"

    # --- bf16 MXU path (fewer vmatmul passes); loosened tolerance ------------
    out_bf = jax.block_until_ready(
        neural_net_forward(xb, packed, batch_tile=1024,
                           compute_dtype=jnp.bfloat16))
    assert jnp.allclose(out_bf, ref_b, atol=1e-2, rtol=1e-2), "mismatch (bf16)"

    print("KERNEL_OK")
</pallas_src>

<mosaic_0001>
module attributes {stable_mosaic.version = 11 : i64} {
  func.func @_mlp_kernel(%arg0: i32, %arg1: memref<1x20xf32, #tpu.memory_space<vmem>>, %arg2: memref<4x32x32xf32, #tpu.memory_space<vmem>>, %arg3: memref<32x128xf32, #tpu.memory_space<vmem>>, %arg4: memref<1x20xf32, #tpu.memory_space<vmem>>) attributes {dimension_semantics = [#tpu.dimension_semantics<parallel>], iteration_bounds = array<i64: 1>, scalar_prefetch = 0 : i64, scratch_operands = 0 : i64, tpu.core_type = #tpu.core_type<tc>, window_params = [{transform_indices = @transform_0, window_bounds = array<i64: 1, 20>}, {pipeline_mode = #tpu.pipeline_mode<synchronous>, transform_indices = @transform_1, window_bounds = array<i64: 4, 32, 32>}, {pipeline_mode = #tpu.pipeline_mode<synchronous>, transform_indices = @transform_2, window_bounds = array<i64: 32, 128>}, {transform_indices = @transform_3, window_bounds = array<i64: 1, 20>}]} {
    %c0 = arith.constant 0 : index
    %c0_0 = arith.constant 0 : index
    %c0_1 = arith.constant 0 : index
    %0 = vector.load %arg2[%c0, %c0_0, %c0_1] : memref<4x32x32xf32, #tpu.memory_space<vmem>>, vector<1x32x1xf32>
    %1 = vector.shape_cast %0 : vector<1x32x1xf32> to vector<32x1xf32>
    %c0_2 = arith.constant 0 : index
    %c0_3 = arith.constant 0 : index
    %2 = vector.load %arg1[%c0_2, %c0_3] : memref<1x20xf32, #tpu.memory_space<vmem>>, vector<1x20xf32>
    %3 = vector.broadcast %1 : vector<32x1xf32> to vector<32x20xf32>
    %4 = vector.broadcast %2 : vector<1x20xf32> to vector<32x20xf32>
    %5 = arith.mulf %3, %4 : vector<32x20xf32>
    %c0_4 = arith.constant 0 : index
    %c0_5 = arith.constant 0 : index
    %6 = vector.load %arg3[%c0_4, %c0_5] : memref<32x128xf32, #tpu.memory_space<vmem>>, vector<32x1xf32>
    %7 = vector.broadcast %6 : vector<32x1xf32> to vector<32x20xf32>
    %8 = arith.addf %5, %7 : vector<32x20xf32>
    %9 = math.tanh %8 : vector<32x20xf32>
    %c1 = arith.constant 1 : index
    %c0_6 = arith.constant 0 : index
    %c0_7 = arith.constant 0 : index
    %10 = vector.load %arg2[%c1, %c0_6, %c0_7] : memref<4x32x32xf32, #tpu.memory_space<vmem>>, vector<1x32x32xf32>
    %11 = vector.shape_cast %10 : vector<1x32x32xf32> to vector<32x32xf32>
    %cst = arith.constant dense<0.000000e+00> : vector<32x20xf32>
    %12 = tpu.matmul %11, %9, %cst {dimension_numbers = #tpu.dot_dimension_numbers<[1], [0], [0], [1], [0, 0, 1, 1], [], []>} : vector<32x32xf32>, vector<32x20xf32>, vector<32x20xf32> -> vector<32x20xf32>
    %c0_8 = arith.constant 0 : index
    %c1_9 = arith.constant 1 : index
    %13 = vector.load %arg3[%c0_8, %c1_9] : memref<32x128xf32, #tpu.memory_space<vmem>>, vector<32x1xf32>
    %14 = vector.broadcast %13 : vector<32x1xf32> to vector<32x20xf32>
    %15 = arith.addf %12, %14 : vector<32x20xf32>
    %16 = math.tanh %15 : vector<32x20xf32>
    %c2 = arith.constant 2 : index
    %c0_10 = arith.constant 0 : index
    %c0_11 = arith.constant 0 : index
    %17 = vector.load %arg2[%c2, %c0_10, %c0_11] : memref<4x32x32xf32, #tpu.memory_space<vmem>>, vector<1x32x32xf32>
    %18 = vector.shape_cast %17 : vector<1x32x32xf32> to vector<32x32xf32>
    %cst_12 = arith.constant dense<0.000000e+00> : vector<32x20xf32>
    %19 = tpu.matmul %18, %16, %cst_12 {dimension_numbers = #tpu.dot_dimension_numbers<[1], [0], [0], [1], [0, 0, 1, 1], [], []>} : vector<32x32xf32>, vector<32x20xf32>, vector<32x20xf32> -> vector<32x20xf32>
    %c0_13 = arith.constant 0 : index
    %c2_14 = arith.constant 2 : index
    %20 = vector.load %arg3[%c0_13, %c2_14] : memref<32x128xf32, #tpu.memory_space<vmem>>, vector<32x1xf32>
    %21 = vector.broadcast %20 : vector<32x1xf32> to vector<32x20xf32>
    %22 = arith.addf %19, %21 : vector<32x20xf32>
    %23 = math.tanh %22 : vector<32x20xf32>
    %c3 = arith.constant 3 : index
    %c0_15 = arith.constant 0 : index
    %c0_16 = arith.constant 0 : index
    %24 = vector.load %arg2[%c3, %c0_15, %c0_16] : memref<4x32x32xf32, #tpu.memory_space<vmem>>, vector<1x32x1xf32>
    %25 = vector.shape_cast %24 : vector<1x32x1xf32> to vector<32x1xf32>
    %26 = vector.broadcast %25 : vector<32x1xf32> to vector<32x20xf32>
    %27 = arith.mulf %26, %23 : vector<32x20xf32>
    %cst_17 = arith.constant dense<0.000000e+00> : vector<20xf32>
    %28 = vector.multi_reduction <add>, %27, %cst_17 [0] : vector<32x20xf32> to vector<20xf32>
    %29 = vector.shape_cast %28 : vector<20xf32> to vector<1x20xf32>
    %c0_18 = arith.constant 0 : index
    %c3_19 = arith.constant 3 : index
    %30 = vector.load %arg3[%c0_18, %c3_19] : memref<32x128xf32, #tpu.memory_space<vmem>>, vector<1x1xf32>
    %31 = vector.broadcast %30 : vector<1x1xf32> to vector<1x20xf32>
    %32 = arith.addf %29, %31 : vector<1x20xf32>
    %c0_20 = arith.constant 0 : index
    %c0_21 = arith.constant 0 : index
    %33 = vector.load %arg4[%c0_20, %c0_21] : memref<1x20xf32, #tpu.memory_space<vmem>>, vector<1x20xf32>
    tpu.vector_store %arg4[%c0_20, %c0_21], %32 {strides = array<i32>} : memref<1x20xf32, #tpu.memory_space<vmem>>, vector<1x20xf32>,
    return
  }
  func.func @transform_0(%arg0: i32) -> (i32, i32) {
    %c0_i32 = arith.constant 0 : i32
    %c0_i32_0 = arith.constant 0 : i32
    return %c0_i32, %arg0 : i32, i32
  }
  func.func @transform_1(%arg0: i32) -> (i32, i32, i32) {
    %c0_i32 = arith.constant 0 : i32
    %c0_i32_0 = arith.constant 0 : i32
    %c0_i32_1 = arith.constant 0 : i32
    %c0_i32_2 = arith.constant 0 : i32
    return %c0_i32, %c0_i32_0, %c0_i32_1 : i32, i32, i32
  }
  func.func @transform_2(%arg0: i32) -> (i32, i32) {
    %c0_i32 = arith.constant 0 : i32
    %c0_i32_0 = arith.constant 0 : i32
    %c0_i32_1 = arith.constant 0 : i32
    return %c0_i32, %c0_i32_0 : i32, i32
  }
  func.func @transform_3(%arg0: i32) -> (i32, i32) {
    %c0_i32 = arith.constant 0 : i32
    %c0_i32_0 = arith.constant 0 : i32
    return %c0_i32, %arg0 : i32, i32
  }
}

</mosaic_0001>

<llo_original>
// kernel: tpu_custom_call.1
$region0: #{tpu_custom_call.1}
  #allocation0 [shape = 'u32[]', space=smem, size = 0x4, offset = 0x4, fixed_abs, tag = 'smem constant byte address 0x4 - core index']
  #allocation1 [shape = 'u32[144,128]{1,0:T(1,128)}', space=vmem, size = 0x12000, scoped, tag = 'internal scratch']
  %s0 = inlined_call_operand.hbm [shape: f32[1,20], index: 0, kind: input, shape index: {}]
  %s1 = inlined_call_operand.hbm [shape: f32[4,32,32], index: 1, kind: input, shape index: {}]
  %s2 = inlined_call_operand.hbm [shape: f32[32,128], index: 2, kind: input, shape index: {}]
  %s3 = inlined_call_operand.hbm [shape: f32[1,20], index: 3, kind: output, shape index: {}]
  %s4 = sld [smem:[#allocation0]]
  $region34: #{tpu_custom_call.1} parent=0
    _
  %s6 = ssub.s32 1, %s4
  %s7 = scalar_select 0, %s6, %s4
  $region1: #{tpu_custom_call.1} parent=0
    #allocation2 [shape = 'u8[512]{0}', space=vmem, size = 0x400, scoped, tag = 'input window, operand 0, single buffered']
    #allocation3 [shape = 's32[1]{0}', space=sflag, size = 0x4, scoped, tag = 'scoped memory for tpu_custom_call.1']
    #allocation4 [shape = 's32[1]{0}', space=sflag, size = 0x4, scoped, tag = 'scoped memory for tpu_custom_call.1']
    #allocation5 [shape = 'u8[65536]{0}', space=vmem, size = 0x10000, scoped, tag = 'input window, operand 1, single buffered']
    #allocation6 [shape = 's32[1]{0}', space=sflag, size = 0x4, scoped, tag = 'scoped memory for tpu_custom_call.1']
    #allocation7 [shape = 'u8[16384]{0}', space=vmem, size = 0x4000, scoped, tag = 'input window, operand 2, single buffered']
    #allocation8 [shape = 'u8[512]{0}', space=vmem, size = 0x400, scoped, tag = 'output window, operand 0, single buffered']
    %8 = vsyncpa [#allocation3], 0
    %9 = vsyncpa [#allocation6], 0
    %10 = vsyncpa [#allocation4], 0
    // Predicated region
    $region2: #{tpu_custom_call.1} parent=1 // pred_check
      _
    $region3: #{tpu_custom_call.1} parent=1 // pred_check_branch
      %12 = sbr.rel (0) target = $region5
    $region4: #{tpu_custom_call.1} parent=1 // pred_region
      %s14 = ssub.s32 16, 16
      %15 = vsyncadd [#allocation3], %s14
      %s17 = sshll.u32 [#allocation2], 4
      %s18 = int_to_ptr.vmem [resolvable:$true] %s17
      %20 = dma.hbm_to_vmem [thread:$0]  %s0, 16, %s18, [#allocation3]
    $region5: #{tpu_custom_call.1} parent=1 // pred_fallthru
      _
    // Predicated region
    $region6: #{tpu_custom_call.1} parent=1 // pred_check
      _
    $region7: #{tpu_custom_call.1} parent=1 // pred_check_branch
      %22 = sbr.rel (0) target = $region9
    $region8: #{tpu_custom_call.1} parent=1 // pred_region
      %s24 = ssub.s32 2048, 2048
      %25 = vsyncadd [#allocation6], %s24
      %s26 = sshll.u32 [#allocation5], 4
      %s27 = int_to_ptr.vmem [resolvable:$true] %s26
      %32 = dma.hbm_to_vmem [thread:$0]  %s1, 2048, %s27, [#allocation6], 128, 128, 8
    $region9: #{tpu_custom_call.1} parent=1 // pred_fallthru
      _
    // Predicated region
    $region10: #{tpu_custom_call.1} parent=1 // pred_check
      _
    $region11: #{tpu_custom_call.1} parent=1 // pred_check_branch
      %34 = sbr.rel (0) target = $region13
    $region12: #{tpu_custom_call.1} parent=1 // pred_region
      %s36 = ssub.s32 512, 512
      %37 = vsyncadd [#allocation6], %s36
      %s38 = sshll.u32 [#allocation7], 4
      %s39 = int_to_ptr.vmem [resolvable:$true] %s38
      %44 = dma.hbm_to_vmem [thread:$0]  %s2, 512, %s39, [#allocation6], 128, 128, 8
    $region13: #{tpu_custom_call.1} parent=1 // pred_fallthru
      _
    // Predicated region
    $region14: #{tpu_custom_call.1} parent=1 // pred_check
      _
    $region15: #{tpu_custom_call.1} parent=1 // pred_check_branch
      %46 = sbr.rel (0) target = $region17
    $region16: #{tpu_custom_call.1} parent=1 // pred_region
      %47 = dma.done [#allocation3], 16
    $region17: #{tpu_custom_call.1} parent=1 // pred_fallthru
      _
    // Predicated region
    $region18: #{tpu_custom_call.1} parent=1 // pred_check
      _
    $region19: #{tpu_custom_call.1} parent=1 // pred_check_branch
      %49 = sbr.rel (0) target = $region21
    $region20: #{tpu_custom_call.1} parent=1 // pred_region
      %50 = dma.done [#allocation6], 2048
    $region21: #{tpu_custom_call.1} parent=1 // pred_fallthru
      _
    // Predicated region
    $region22: #{tpu_custom_call.1} parent=1 // pred_check
      _
    $region23: #{tpu_custom_call.1} parent=1 // pred_check_branch
      %52 = sbr.rel (0) target = $region25
    $region24: #{tpu_custom_call.1} parent=1 // pred_region
      %53 = dma.done [#allocation6], 512
    $region25: #{tpu_custom_call.1} parent=1 // pred_fallthru
      _
    %v54 = vld [vmem:[#allocation5] sm:$0xff]
    %v55 = vld [vmem:[#allocation5 + $0x8] sm:$0xff]
    %v56 = vld [vmem:[#allocation5 + $0x10] sm:$0xff]
    %v57 = vld [vmem:[#allocation5 + $0x18] sm:$0xff]
    %v58 = vld [vmem:[#allocation2] sm:$0x1]
    %60 = vset.pattern.permute.xlu0 0
    %61 = vperm.xlu0 %60, %v54
    %v62 = vpop.permute.xlu0 %61
    %65 = vset.pattern.permute.xlu0 0
    %66 = vperm.xlu0 %65, %v55
    %v67 = vpop.permute.xlu0 %66
    %70 = vset.pattern.permute.xlu0 0
    %71 = vperm.xlu0 %70, %v56
    %v72 = vpop.permute.xlu0 %71
    %75 = vset.pattern.permute.xlu0 0
    %76 = vperm.xlu0 %75, %v57
    %v77 = vpop.permute.xlu0 %76
    %v80 = vlaneseq
    %v81 = vshrl.u32 %v80, 7
    %v82 = vsub.s32 0, %v81
    %v83 = vrot.slane %v58, %v82
    %v85 = vmul.f32 %v62, %v83
    %v86 = vmul.f32 %v67, %v83
    %v87 = vmul.f32 %v72, %v83
    %v88 = vmul.f32 %v77, %v83
    %v89 = vld [vmem:[#allocation7] sm:$0xff]
    %v90 = vld [vmem:[#allocation7 + $0x8] sm:$0xff]
    %v91 = vld [vmem:[#allocation7 + $0x10] sm:$0xff]
    %v92 = vld [vmem:[#allocation7 + $0x18] sm:$0xff]
    %94 = vset.pattern.permute.xlu0 0
    %95 = vperm.xlu0 %94, %v89
    %v96 = vpop.permute.xlu0 %95
    %99 = vset.pattern.permute.xlu0 0
    %100 = vperm.xlu0 %99, %v90
    %v101 = vpop.permute.xlu0 %100
    %104 = vset.pattern.permute.xlu0 0
    %105 = vperm.xlu0 %104, %v91
    %v106 = vpop.permute.xlu0 %105
    %109 = vset.pattern.permute.xlu0 0
    %110 = vperm.xlu0 %109, %v92
    %v111 = vpop.permute.xlu0 %110
    %v113 = vadd.f32 %v85, %v96
    %v114 = vadd.f32 %v86, %v101
    %v115 = vadd.f32 %v87, %v106
    %v116 = vadd.f32 %v88, %v111
    %v117 = vtanh.pop %v113
    %v118 = vtanh.pop %v114
    %v119 = vtanh.pop %v115
    %v120 = vtanh.pop %v116
    %s121 = scalar_lea.vmem [#allocation5], 32
    %v122 = vld [vmem:[%s121] sm:$0xff]
    %v123 = vld [vmem:[%s121 + $0x8] sm:$0xff]
    %v124 = vld [vmem:[%s121 + $0x10] sm:$0xff]
    %v125 = vld [vmem:[%s121 + $0x18] sm:$0xff]
    %126 = vset.pattern.permute.xlu0 1
    %127 = vperm.xlu0 %126, %v89
    %v128 = vpop.permute.xlu0 %127
    %130 = vset.pattern.permute.xlu0 1
    %131 = vperm.xlu0 %130, %v90
    %v132 = vpop.permute.xlu0 %131
    %134 = vset.pattern.permute.xlu0 1
    %135 = vperm.xlu0 %134, %v91
    %v136 = vpop.permute.xlu0 %135
    %138 = vset.pattern.permute.xlu0 1
    %139 = vperm.xlu0 %138, %v92
    %v140 = vpop.permute.xlu0 %139
    %vm142 = vcmask 261120
    %v144 = vsel %vm142, %v122, 0
    %v147 = vsel %vm142, %v123, 0
    %v150 = vsel %vm142, %v124, 0
    %v153 = vsel %vm142, %v125, 0
    %155 = vmatprep.subr.mxu0 0.0
    %156 = vmatpush1.msra.mxu0 0.0
    %157 = vmatprep.subr.mxu0 0.0
    %158 = vmatpush1.msra.mxu0 0.0
    %159 = vmatprep.subr.mxu0 0.0
    %160 = vmatpush1.msra.mxu0 0.0
    %161 = vmatprep.subr.mxu0 0.0
    %162 = vmatpush1.msra.mxu0 0.0
    %163 = vmatprep.subr.mxu0 0.0
    %164 = vmatpush1.msra.mxu0 0.0
    %165 = vmatprep.subr.mxu0 0.0
    %166 = vmatpush1.msra.mxu0 0.0
    %167 = vmatprep.subr.mxu0 0.0
    %168 = vmatpush1.msra.mxu0 0.0
    %169 = vmatprep.subr.mxu0 0.0
    %170 = vmatpush1.msra.mxu0 0.0
    %171 = vmatprep.subr.mxu0 0.0
    %172 = vmatpush1.msra.mxu0 0.0
    %173 = vmatprep.subr.mxu0 0.0
    %174 = vmatpush1.msra.mxu0 0.0
    %175 = vmatprep.subr.mxu0 0.0
    %176 = vmatpush1.msra.mxu0 0.0
    %177 = vmatprep.subr.mxu0 0.0
    %178 = vmatpush1.msra.mxu0 0.0
    %179 = vmatprep.subr.mxu0 0.0
    %180 = vmatpush1.msra.mxu0 %v120
    %181 = vmatprep.subr.mxu0 0.0
    %182 = vmatpush1.msra.mxu0 %v119
    %183 = vmatprep.subr.mxu0 0.0
    %184 = vmatpush1.msra.mxu0 %v118
    %185 = vmatprep.subr.mxu0 0.0
    %186 = vmatpush1.msra.mxu0 %v117
    %187 = vmatprep.subr.mxu0 0.0
    %188 = vmatpush2.msra.mxu0 0.0
    %189 = vmatprep.subr.mxu0 0.0
    %190 = vmatpush2.msra.mxu0 0.0
    %191 = vmatprep.subr.mxu0 0.0
    %192 = vmatpush2.msra.mxu0 0.0
    %193 = vmatprep.subr.mxu0 0.0
    %194 = vmatpush2.msra.mxu0 0.0
    %195 = vmatprep.subr.mxu0 0.0
    %196 = vmatpush2.msra.mxu0 0.0
    %197 = vmatprep.subr.mxu0 0.0
    %198 = vmatpush2.msra.mxu0 0.0
    %199 = vmatprep.subr.mxu0 0.0
    %200 = vmatpush2.msra.mxu0 0.0
    %201 = vmatprep.subr.mxu0 0.0
    %202 = vmatpush2.msra.mxu0 0.0
    %203 = vmatprep.subr.mxu0 0.0
    %204 = vmatpush2.msra.mxu0 0.0
    %205 = vmatprep.subr.mxu0 0.0
    %206 = vmatpush2.msra.mxu0 0.0
    %207 = vmatprep.subr.mxu0 0.0
    %208 = vmatpush2.msra.mxu0 0.0
    %209 = vmatprep.subr.mxu0 0.0
    %210 = vmatpush2.msra.mxu0 0.0
    %211 = vmatprep.subr.mxu0 0.0
    %212 = vmatpush2.msra.mxu0 0.0
    %213 = vmatprep.subr.mxu0 0.0
    %214 = vmatpush2.msra.mxu0 0.0
    %215 = vmatprep.subr.mxu0 0.0
    %216 = vmatpush2.msra.mxu0 0.0
    %217 = vmatprep.subr.mxu0 0.0
    %218 = vmatpush2.msra.mxu0 0.0
    %219 = vmatprep.mubr.f32.mxu0 0.0
    %220 = vmatmul.mubr.f32.gmra.mxu0 %v144
    %v221 = vpop.f32.mrf.mxu0
    %v222 = vadd.f32 %v128, %v221
    %v223 = vpop.f32.mrf.mxu0
    %224 = vmatprep.mubr.f32.mxu0 0.0
    %225 = vmatmul.mubr.f32.gmra.mxu0 %v147
    %v226 = vpop.f32.mrf.mxu0
    %v227 = vadd.f32 %v132, %v226
    %v228 = vpop.f32.mrf.mxu0
    %229 = vmatprep.mubr.f32.mxu0 0.0
    %230 = vmatmul.mubr.f32.gmra.mxu0 %v150
    %v231 = vpop.f32.mrf.mxu0
    %v232 = vadd.f32 %v136, %v231
    %v233 = vpop.f32.mrf.mxu0
    %234 = vmatprep.mubr.f32.mxu0 0.0
    %235 = vmatmul.mubr.f32.gmra.mxu0 %v153
    %v236 = vpop.f32.mrf.mxu0
    %v237 = vadd.f32 %v140, %v236
    %v238 = vpop.f32.mrf.mxu0
    %239 = vdwg.mxu0
    %v240 = vtanh.pop %v222
    %v241 = vtanh.pop %v227
    %v242 = vtanh.pop %v232
    %v243 = vtanh.pop %v237
    %s244 = scalar_lea.vmem [#allocation5], 64
    %v245 = vld [vmem:[%s244] sm:$0xff]
    %v246 = vld [vmem:[%s244 + $0x8] sm:$0xff]
    %v247 = vld [vmem:[%s244 + $0x10] sm:$0xff]
    %v248 = vld [vmem:[%s244 + $0x18] sm:$0xff]
    %249 = vset.pattern.permute.xlu0 2
    %250 = vperm.xlu0 %249, %v89
    %v251 = vpop.permute.xlu0 %250
    %253 = vset.pattern.permute.xlu0 2
    %254 = vperm.xlu0 %253, %v90
    %v255 = vpop.permute.xlu0 %254
    %257 = vset.pattern.permute.xlu0 2
    %258 = vperm.xlu0 %257, %v91
    %v259 = vpop.permute.xlu0 %258
    %261 = vset.pattern.permute.xlu0 2
    %262 = vperm.xlu0 %261, %v92
    %v263 = vpop.permute.xlu0 %262
    %v266 = vsel %vm142, %v245, 0
    %v269 = vsel %vm142, %v246, 0
    %v272 = vsel %vm142, %v247, 0
    %v275 = vsel %vm142, %v248, 0
    %277 = vmatprep.subr.mxu0 0.0
    %278 = vmatpush1.msra.mxu0 0.0
    %279 = vmatprep.subr.mxu0 0.0
    %280 = vmatpush1.msra.mxu0 0.0
    %281 = vmatprep.subr.mxu0 0.0
    %282 = vmatpush1.msra.mxu0 0.0
    %283 = vmatprep.subr.mxu0 0.0
    %284 = vmatpush1.msra.mxu0 0.0
    %285 = vmatprep.subr.mxu0 0.0
    %286 = vmatpush1.msra.mxu0 0.0
    %287 = vmatprep.subr.mxu0 0.0
    %288 = vmatpush1.msra.mxu0 0.0
    %289 = vmatprep.subr.mxu0 0.0
    %290 = vmatpush1.msra.mxu0 0.0
    %291 = vmatprep.subr.mxu0 0.0
    %292 = vmatpush1.msra.mxu0 0.0
    %293 = vmatprep.subr.mxu0 0.0
    %294 = vmatpush1.msra.mxu0 0.0
    %295 = vmatprep.subr.mxu0 0.0
    %296 = vmatpush1.msra.mxu0 0.0
    %297 = vmatprep.subr.mxu0 0.0
    %298 = vmatpush1.msra.mxu0 0.0
    %299 = vmatprep.subr.mxu0 0.0
    %300 = vmatpush1.msra.mxu0 0.0
    %301 = vmatprep.subr.mxu0 0.0
    %302 = vmatpush1.msra.mxu0 %v243
    %303 = vmatprep.subr.mxu0 0.0
    %304 = vmatpush1.msra.mxu0 %v242
    %305 = vmatprep.subr.mxu0 0.0
    %306 = vmatpush1.msra.mxu0 %v241
    %307 = vmatprep.subr.mxu0 0.0
    %308 = vmatpush1.msra.mxu0 %v240
    %309 = vmatprep.subr.mxu0 0.0
    %310 = vmatpush2.msra.mxu0 0.0
    %311 = vmatprep.subr.mxu0 0.0
    %312 = vmatpush2.msra.mxu0 0.0
    %313 = vmatprep.subr.mxu0 0.0
    %314 = vmatpush2.msra.mxu0 0.0
    %315 = vmatprep.subr.mxu0 0.0
    %316 = vmatpush2.msra.mxu0 0.0
    %317 = vmatprep.subr.mxu0 0.0
    %318 = vmatpush2.msra.mxu0 0.0
    %319 = vmatprep.subr.mxu0 0.0
    %320 = vmatpush2.msra.mxu0 0.0
    %321 = vmatprep.subr.mxu0 0.0
    %322 = vmatpush2.msra.mxu0 0.0
    %323 = vmatprep.subr.mxu0 0.0
    %324 = vmatpush2.msra.mxu0 0.0
    %325 = vmatprep.subr.mxu0 0.0
    %326 = vmatpush2.msra.mxu0 0.0
    %327 = vmatprep.subr.mxu0 0.0
    %328 = vmatpush2.msra.mxu0 0.0
    %329 = vmatprep.subr.mxu0 0.0
    %330 = vmatpush2.msra.mxu0 0.0
    %331 = vmatprep.subr.mxu0 0.0
    %332 = vmatpush2.msra.mxu0 0.0
    %333 = vmatprep.subr.mxu0 0.0
    %334 = vmatpush2.msra.mxu0 0.0
    %335 = vmatprep.subr.mxu0 0.0
    %336 = vmatpush2.msra.mxu0 0.0
    %337 = vmatprep.subr.mxu0 0.0
    %338 = vmatpush2.msra.mxu0 0.0
    %339 = vmatprep.subr.mxu0 0.0
    %340 = vmatpush2.msra.mxu0 0.0
    %341 = vmatprep.mubr.f32.mxu0 0.0
    %342 = vmatmul.mubr.f32.gmra.mxu0 %v266
    %v343 = vpop.f32.mrf.mxu0
    %v344 = vadd.f32 %v251, %v343
    %v345 = vpop.f32.mrf.mxu0
    %346 = vmatprep.mubr.f32.mxu0 0.0
    %347 = vmatmul.mubr.f32.gmra.mxu0 %v269
    %v348 = vpop.f32.mrf.mxu0
    %v349 = vadd.f32 %v255, %v348
    %v350 = vpop.f32.mrf.mxu0
    %351 = vmatprep.mubr.f32.mxu0 0.0
    %352 = vmatmul.mubr.f32.gmra.mxu0 %v272
    %v353 = vpop.f32.mrf.mxu0
    %v354 = vadd.f32 %v259, %v353
    %v355 = vpop.f32.mrf.mxu0
    %356 = vmatprep.mubr.f32.mxu0 0.0
    %357 = vmatmul.mubr.f32.gmra.mxu0 %v275
    %v358 = vpop.f32.mrf.mxu0
    %v359 = vadd.f32 %v263, %v358
    %v360 = vpop.f32.mrf.mxu0
    %361 = vdwg.mxu0
    %v362 = vtanh.pop %v344
    %v363 = vtanh.pop %v349
    %v364 = vtanh.pop %v354
    %v365 = vtanh.pop %v359
    %s366 = scalar_lea.vmem [#allocation5], 96
    %v367 = vld [vmem:[%s366] sm:$0xff]
    %v368 = vld [vmem:[%s366 + $0x8] sm:$0xff]
    %v369 = vld [vmem:[%s366 + $0x10] sm:$0xff]
    %v370 = vld [vmem:[%s366 + $0x18] sm:$0xff]
    %372 = vset.pattern.permute.xlu0 0
    %373 = vperm.xlu0 %372, %v367
    %v374 = vpop.permute.xlu0 %373
    %377 = vset.pattern.permute.xlu0 0
    %378 = vperm.xlu0 %377, %v368
    %v379 = vpop.permute.xlu0 %378
    %382 = vset.pattern.permute.xlu0 0
    %383 = vperm.xlu0 %382, %v369
    %v384 = vpop.permute.xlu0 %383
    %387 = vset.pattern.permute.xlu0 0
    %388 = vperm.xlu0 %387, %v370
    %v389 = vpop.permute.xlu0 %388
    %v391 = vmul.f32 %v374, %v362
    %v392 = vmul.f32 %v379, %v363
    %v393 = vmul.f32 %v384, %v364
    %v394 = vmul.f32 %v389, %v365
    %vm395 = vcmask 162816
    %v396 = vsel %vm395, %v391, 0.0
    %v397 = vsel %vm395, %v392, 0.0
    %v398 = vadd.f32 %v396, %v397
    %v399 = vsel %vm395, %v393, 0.0
    %v400 = vadd.f32 %v398, %v399
    %v401 = vsel %vm395, %v394, 0.0
    %v402 = vadd.f32 %v400, %v401
    %v403 = vrot.slane %v402, 4
    %v404 = vadd.f32 %v402, %v403
    %v405 = vrot.slane %v404, 2
    %v406 = vadd.f32 %v404, %v405
    %v407 = vrot.slane %v406, 1
    %v408 = vadd.f32 %v406, %v407
    %v409 = vld [vmem:[#allocation7] sm:$0x1]
    %411 = vset.pattern.permute.xlu0 3
    %412 = vperm.xlu0 %411, %v409
    %v413 = vpop.permute.xlu0 %412
    %v415 = vadd.f32 %v408, %v413
    %vm416 = vcmask 155648
    %417 = vst.msk [vmem:[#allocation8] sm:$0x1] %vm416, %v415
    // Predicated region
    $region26: #{tpu_custom_call.1} parent=1 // pred_check
      _
    $region27: #{tpu_custom_call.1} parent=1 // pred_check_branch
      %419 = sbr.rel (0) target = $region29
    $region28: #{tpu_custom_call.1} parent=1 // pred_region
      %s421 = ssub.s32 16, 16
      %422 = vsyncadd [#allocation4], %s421
      %s424 = sshll.u32 [#allocation8], 4
      %s425 = int_to_ptr.vmem [resolvable:$true] %s424
      %427 = dma.vmem_to_hbm [thread:$0]  %s425, 16, %s3, [#allocation4]
    $region29: #{tpu_custom_call.1} parent=1 // pred_fallthru
      _
    // Predicated region
    $region30: #{tpu_custom_call.1} parent=1 // pred_check
      _
    $region31: #{tpu_custom_call.1} parent=1 // pred_check_branch
      %429 = sbr.rel (0) target = $region33
    $region32: #{tpu_custom_call.1} parent=1 // pred_region
      %430 = dma.done [#allocation4], 16
    $region33: #{tpu_custom_call.1} parent=1 // pred_fallthru
      _
    %431 = vsyncpa [#allocation3], 1
    %432 = vsyncpa [#allocation6], 1
    %433 = vsyncpa [#allocation4], 1

</llo_original>
